<compile_context>
chip_gen: v5e
topology: v5e:2x2
jax: 0.10.0
libtpu: 0.0.40
codegen_flags: <defaults>
</compile_context>

<pallas_src>
import functools

import jax
import jax.numpy as jnp
from jax import lax
from jax.experimental import pallas as pl
from jax.experimental.pallas import tpu as pltpu


def _vn_bn_stats_kernel(x_ref, mean_ref, rstd_ref, acc_n_ref, acc_s_ref,
                        *, eps, inv_count):
    """Grid (C, nN); nN is the 'arbitrary' reduction axis.

    x_ref block: (3, B, TN).  Accumulates elementwise partial sums of norm and
    norm^2 in VMEM scratch; reduces to per-channel mean / rstd at the last tile.
    """
    j = pl.program_id(1)

    @pl.when(j == 0)
    def _init():
        acc_n_ref[...] = jnp.zeros_like(acc_n_ref)
        acc_s_ref[...] = jnp.zeros_like(acc_s_ref)

    x0 = x_ref[0].astype(jnp.float32)            # (B, TN)
    x1 = x_ref[1].astype(jnp.float32)
    x2 = x_ref[2].astype(jnp.float32)
    nsq = x0 * x0 + x1 * x1 + x2 * x2            # |v|^2, pure VPU
    # sqrt (not nsq*rsqrt) so zero-padded columns contribute exactly 0.
    acc_n_ref[...] += jnp.sqrt(nsq)              # running sum of |v|
    acc_s_ref[...] += nsq                        # running sum of |v|^2

    @pl.when(j == pl.num_programs(1) - 1)
    def _finalize():
        s1 = jnp.sum(acc_n_ref[...])
        s2 = jnp.sum(acc_s_ref[...])
        mean = s1 * inv_count
        var = s2 * inv_count - mean * mean       # biased variance, single sweep
        rstd = lax.rsqrt(var + eps)              # EUP rsqrt
        mean_ref[...] = jnp.full(mean_ref.shape, mean, dtype=jnp.float32)
        rstd_ref[...] = jnp.full(rstd_ref.shape, rstd, dtype=jnp.float32)


def _vn_bn_apply_kernel(a_ref, b_ref, x_ref, o_ref):
    """Grid (C, nN), both parallel.

    out_k = x_k * (a + b / |v|)  where a = gamma*rstd, b = beta - mean*a.
    x_ref / o_ref blocks: (3, B, TN); a/b are per-channel scalars in SMEM.
    """
    c = pl.program_id(0)
    a = a_ref[c]
    b = b_ref[c]
    x0 = x_ref[0].astype(jnp.float32)
    x1 = x_ref[1].astype(jnp.float32)
    x2 = x_ref[2].astype(jnp.float32)
    inv_norm = lax.rsqrt(x0 * x0 + x1 * x1 + x2 * x2)   # EUP; no divides
    scale = a + b * inv_norm
    o_ref[0] = (x0 * scale).astype(o_ref.dtype)
    o_ref[1] = (x1 * scale).astype(o_ref.dtype)
    o_ref[2] = (x2 * scale).astype(o_ref.dtype)


def _pick_tile(n_pad, b, itemsize, max_tile):
    """Largest lane tile TN (multiple of 128, divides n_pad) under a ~2 MiB
    x-block budget (3*B*TN*itemsize).  Keeps double-buffered in+out blocks a
    few MiB -> safely under the 32 MiB scoped VMEM on v5e/v6e/v7x."""
    budget = 2 * 1024 * 1024
    if n_pad <= max_tile and 3 * b * n_pad * itemsize <= budget:
        return n_pad
    tn = 128
    cand = 256
    while cand <= min(n_pad, max_tile):
        if n_pad % cand == 0 and 3 * b * cand * itemsize <= budget:
            tn = cand
        cand *= 2
    return tn


def vn_batch_norm(x, gamma, beta, *, eps=1e-5, max_tile=2048):
    """x: [B, C, 3, *spatial] (spatial may be empty, 1-D or 2-D)."""
    orig_shape = x.shape
    assert x.ndim >= 3 and x.shape[2] == 3, "axis 2 must be the 3-vector dim"
    B, C = x.shape[0], x.shape[1]
    N = 1
    for d in x.shape[3:]:
        N *= int(d)
    x4 = x.reshape(B, C, 3, N)

    # Pad the sample axis to a multiple of 128 -> lane-dense, unmasked stores.
    # Padded columns are zero; stats use the real count so they are unaffected.
    N_pad = ((N + 127) // 128) * 128
    if N_pad != N:
        x4 = jnp.pad(x4, ((0, 0), (0, 0), (0, 0), (0, N_pad - N)))

    # Layout plumbing: channel-major, 3-vector component as an outer block
    # axis, trailing (B, N_pad) dense dims (sublane=B, lane=samples).
    xt = jnp.transpose(x4, (1, 2, 0, 3))          # (C, 3, B, N_pad)

    itemsize = jnp.dtype(x.dtype).itemsize
    TN = _pick_tile(N_pad, B, itemsize, max_tile)
    nN = N_pad // TN

    vmem_limit = 32 * 1024 * 1024                 # explicit; safe on v5e/v6e/v7x
    inv_count = 1.0 / float(B * N)                # real (unpadded) count

    # ---- Pass 1: per-channel BN statistics over (B, N) ---------------------
    mean_t, rstd_t = pl.pallas_call(
        functools.partial(_vn_bn_stats_kernel, eps=float(eps),
                          inv_count=inv_count),
        out_shape=(
            jax.ShapeDtypeStruct((C, 8, 128), jnp.float32),   # mean (broadcast)
            jax.ShapeDtypeStruct((C, 8, 128), jnp.float32),   # rstd (broadcast)
        ),
        grid_spec=pltpu.PrefetchScalarGridSpec(
            num_scalar_prefetch=0,
            grid=(C, nN),
            in_specs=[
                pl.BlockSpec((None, 3, B, TN), lambda c, j: (c, 0, 0, j)),
            ],
            out_specs=[
                pl.BlockSpec((None, 8, 128), lambda c, j: (c, 0, 0)),
                pl.BlockSpec((None, 8, 128), lambda c, j: (c, 0, 0)),
            ],
            scratch_shapes=[
                pltpu.VMEM((B, TN), jnp.float32),   # running sum of |v|
                pltpu.VMEM((B, TN), jnp.float32),   # running sum of |v|^2
            ],
        ),
        compiler_params=pltpu.CompilerParams(
            dimension_semantics=("parallel", "arbitrary"),
            vmem_limit_bytes=vmem_limit,
        ),
    )(xt)

    mean = mean_t[:, 0, 0]
    rstd = rstd_t[:, 0, 0]
    a = gamma.astype(jnp.float32) * rstd          # per-channel scale
    b = beta.astype(jnp.float32) - mean * a       # per-channel shift

    # ---- Pass 2: apply  out = x * (a + b / |v|) ----------------------------
    out_t = pl.pallas_call(
        _vn_bn_apply_kernel,
        out_shape=jax.ShapeDtypeStruct((C, 3, B, N_pad), x.dtype),
        grid_spec=pltpu.PrefetchScalarGridSpec(
            num_scalar_prefetch=0,
            grid=(C, nN),
            in_specs=[
                pl.BlockSpec(memory_space=pltpu.SMEM),          # a (C,)
                pl.BlockSpec(memory_space=pltpu.SMEM),          # b (C,)
                pl.BlockSpec((None, 3, B, TN), lambda c, j: (c, 0, 0, j)),
            ],
            out_specs=pl.BlockSpec((None, 3, B, TN),
                                   lambda c, j: (c, 0, 0, j)),
        ),
        compiler_params=pltpu.CompilerParams(
            dimension_semantics=("parallel", "parallel"),
            vmem_limit_bytes=vmem_limit,
        ),
    )(a, b, xt)

    out = jnp.transpose(out_t, (2, 0, 1, 3))      # (B, C, 3, N_pad)
    if N_pad != N:
        out = out[..., :N]
    return out.reshape(orig_shape)


def _reference(x, gamma, beta, eps=1e-5):
    # pure-JAX reference mirroring the PyTorch forward (training-mode BN)
    norm = jnp.sqrt(jnp.sum(x * x, axis=2))                  # [B, C, N...]
    red_axes = (0,) + tuple(range(2, norm.ndim))
    mean = jnp.mean(norm, axis=red_axes, keepdims=True)
    var = jnp.mean((norm - mean) ** 2, axis=red_axes, keepdims=True)
    g = gamma.reshape((1, -1) + (1,) * (norm.ndim - 2))
    b = beta.reshape((1, -1) + (1,) * (norm.ndim - 2))
    norm_bn = (norm - mean) / jnp.sqrt(var + eps) * g + b
    return x / jnp.expand_dims(norm, 2) * jnp.expand_dims(norm_bn, 2)


if __name__ == "__main__":
    key = jax.random.PRNGKey(0)
    k1, k2, k3, k4 = jax.random.split(key, 4)

    # dim == 4 case: x is [B, N_feat, 3, N_samples].  N=300 pads to 384 and,
    # with max_tile=128, exercises the multi-tile (nN=3) accumulation path.
    B, C, N = 2, 4, 300
    x = jax.random.normal(k1, (B, C, 3, N), dtype=jnp.float32)
    gamma = 1.0 + 0.1 * jax.random.normal(k2, (C,), dtype=jnp.float32)
    beta = 0.1 * jax.random.normal(k3, (C,), dtype=jnp.float32)

    out = jax.block_until_ready(vn_batch_norm(x, gamma, beta, max_tile=128))
    ref = _reference(x, gamma, beta)
    assert out.shape == x.shape and out.dtype == x.dtype
    assert jnp.allclose(out, ref, atol=1e-4, rtol=5e-4), "dim4 mismatch"

    # dim == 5 case: x is [B, N_feat, 3, H, W] (spatial dims flattened).
    x5 = jax.random.normal(k4, (2, 3, 3, 4, 5), dtype=jnp.float32)
    g5 = jnp.ones((3,), jnp.float32)
    b5 = jnp.zeros((3,), jnp.float32)
    out5 = jax.block_until_ready(vn_batch_norm(x5, g5, b5))
    ref5 = _reference(x5, g5, b5)
    assert out5.shape == x5.shape and out5.dtype == x5.dtype
    assert jnp.allclose(out5, ref5, atol=1e-4, rtol=5e-4), "dim5 mismatch"

    print("KERNEL_OK")
</pallas_src>

<mosaic_0001>
module attributes {stable_mosaic.version = 11 : i64} {
  func.func @_vn_bn_stats_kernel(%arg0: i32, %arg1: i32, %arg2: memref<1x3x2x128xf32, #tpu.memory_space<vmem>>, %arg3: memref<1x8x128xf32, #tpu.memory_space<vmem>>, %arg4: memref<1x8x128xf32, #tpu.memory_space<vmem>>, %arg5: memref<2x128xf32, #tpu.memory_space<vmem>>, %arg6: memref<2x128xf32, #tpu.memory_space<vmem>>) attributes {dimension_semantics = [#tpu.dimension_semantics<parallel>, #tpu.dimension_semantics<arbitrary>], iteration_bounds = array<i64: 4, 3>, scalar_prefetch = 0 : i64, scratch_operands = 2 : i64, tpu.core_type = #tpu.core_type<tc>, window_params = [{transform_indices = @transform_0, window_bounds = array<i64: 1, 3, 2, 128>}, {transform_indices = @transform_1, window_bounds = array<i64: 1, 8, 128>}, {transform_indices = @transform_2, window_bounds = array<i64: 1, 8, 128>}]} {
    %c0_i32 = arith.constant 0 : i32
    %0 = arith.cmpi eq, %arg1, %c0_i32 : i32
    %1 = arith.extui %0 : i1 to i32
    %c0_i32_0 = arith.constant 0 : i32
    %2 = arith.cmpi ne, %1, %c0_i32_0 : i32
    scf.if %2 {
      %cst = arith.constant 0.000000e+00 : f32
      %24 = vector.broadcast %cst : f32 to vector<2x128xf32>
      %c0_19 = arith.constant 0 : index
      %c0_20 = arith.constant 0 : index
      %25 = vector.load %arg5[%c0_19, %c0_20] : memref<2x128xf32, #tpu.memory_space<vmem>>, vector<2x128xf32>
      tpu.vector_store %arg5[%c0_19, %c0_20], %24 {strides = array<i32>} : memref<2x128xf32, #tpu.memory_space<vmem>>, vector<2x128xf32>,
      %cst_21 = arith.constant 0.000000e+00 : f32
      %26 = vector.broadcast %cst_21 : f32 to vector<2x128xf32>
      %c0_22 = arith.constant 0 : index
      %c0_23 = arith.constant 0 : index
      %27 = vector.load %arg6[%c0_22, %c0_23] : memref<2x128xf32, #tpu.memory_space<vmem>>, vector<2x128xf32>
      tpu.vector_store %arg6[%c0_22, %c0_23], %26 {strides = array<i32>} : memref<2x128xf32, #tpu.memory_space<vmem>>, vector<2x128xf32>,
    } else {
    }
    %c0 = arith.constant 0 : index
    %c0_1 = arith.constant 0 : index
    %c0_2 = arith.constant 0 : index
    %c0_3 = arith.constant 0 : index
    %3 = vector.load %arg2[%c0, %c0_1, %c0_2, %c0_3] : memref<1x3x2x128xf32, #tpu.memory_space<vmem>>, vector<1x1x2x128xf32>
    %4 = vector.shape_cast %3 : vector<1x1x2x128xf32> to vector<2x128xf32>
    %c0_4 = arith.constant 0 : index
    %c1 = arith.constant 1 : index
    %c0_5 = arith.constant 0 : index
    %c0_6 = arith.constant 0 : index
    %5 = vector.load %arg2[%c0_4, %c1, %c0_5, %c0_6] : memref<1x3x2x128xf32, #tpu.memory_space<vmem>>, vector<1x1x2x128xf32>
    %6 = vector.shape_cast %5 : vector<1x1x2x128xf32> to vector<2x128xf32>
    %c0_7 = arith.constant 0 : index
    %c2 = arith.constant 2 : index
    %c0_8 = arith.constant 0 : index
    %c0_9 = arith.constant 0 : index
    %7 = vector.load %arg2[%c0_7, %c2, %c0_8, %c0_9] : memref<1x3x2x128xf32, #tpu.memory_space<vmem>>, vector<1x1x2x128xf32>
    %8 = vector.shape_cast %7 : vector<1x1x2x128xf32> to vector<2x128xf32>
    %9 = arith.mulf %4, %4 : vector<2x128xf32>
    %10 = arith.mulf %6, %6 : vector<2x128xf32>
    %11 = arith.addf %9, %10 : vector<2x128xf32>
    %12 = arith.mulf %8, %8 : vector<2x128xf32>
    %13 = arith.addf %11, %12 : vector<2x128xf32>
    %c0_10 = arith.constant 0 : index
    %c0_11 = arith.constant 0 : index
    %14 = vector.load %arg5[%c0_10, %c0_11] : memref<2x128xf32, #tpu.memory_space<vmem>>, vector<2x128xf32>
    %15 = math.sqrt %13 : vector<2x128xf32>
    %16 = arith.addf %14, %15 : vector<2x128xf32>
    %c0_12 = arith.constant 0 : index
    %c0_13 = arith.constant 0 : index
    %17 = vector.load %arg5[%c0_12, %c0_13] : memref<2x128xf32, #tpu.memory_space<vmem>>, vector<2x128xf32>
    tpu.vector_store %arg5[%c0_12, %c0_13], %16 {strides = array<i32>} : memref<2x128xf32, #tpu.memory_space<vmem>>, vector<2x128xf32>,
    %c0_14 = arith.constant 0 : index
    %c0_15 = arith.constant 0 : index
    %18 = vector.load %arg6[%c0_14, %c0_15] : memref<2x128xf32, #tpu.memory_space<vmem>>, vector<2x128xf32>
    %19 = arith.addf %18, %13 : vector<2x128xf32>
    %c0_16 = arith.constant 0 : index
    %c0_17 = arith.constant 0 : index
    %20 = vector.load %arg6[%c0_16, %c0_17] : memref<2x128xf32, #tpu.memory_space<vmem>>, vector<2x128xf32>
    tpu.vector_store %arg6[%c0_16, %c0_17], %19 {strides = array<i32>} : memref<2x128xf32, #tpu.memory_space<vmem>>, vector<2x128xf32>,
    %c2_i32 = arith.constant 2 : i32
    %21 = arith.cmpi eq, %arg1, %c2_i32 : i32
    %22 = arith.extui %21 : i1 to i32
    %c0_i32_18 = arith.constant 0 : i32
    %23 = arith.cmpi ne, %22, %c0_i32_18 : i32
    scf.if %23 {
      %c0_19 = arith.constant 0 : index
      %c0_20 = arith.constant 0 : index
      %24 = vector.load %arg5[%c0_19, %c0_20] : memref<2x128xf32, #tpu.memory_space<vmem>>, vector<2x128xf32>
      %25 = vector.shape_cast %24 : vector<2x128xf32> to vector<1x2x128xf32>
      %cst = arith.constant dense<0.000000e+00> : vector<1xf32>
      %26 = vector.multi_reduction <add>, %25, %cst [1, 2] : vector<1x2x128xf32> to vector<1xf32>
      %27 = vector.shape_cast %26 : vector<1xf32> to vector<1x1x1xf32>
      %28 = vector.extract %27[0, 0, 0] : f32 from vector<1x1x1xf32>
      %c0_21 = arith.constant 0 : index
      %c0_22 = arith.constant 0 : index
      %29 = vector.load %arg6[%c0_21, %c0_22] : memref<2x128xf32, #tpu.memory_space<vmem>>, vector<2x128xf32>
      %30 = vector.shape_cast %29 : vector<2x128xf32> to vector<1x2x128xf32>
      %cst_23 = arith.constant dense<0.000000e+00> : vector<1xf32>
      %31 = vector.multi_reduction <add>, %30, %cst_23 [1, 2] : vector<1x2x128xf32> to vector<1xf32>
      %32 = vector.shape_cast %31 : vector<1xf32> to vector<1x1x1xf32>
      %33 = vector.extract %32[0, 0, 0] : f32 from vector<1x1x1xf32>
      %cst_24 = arith.constant 0.00166666671 : f32
      %34 = arith.mulf %28, %cst_24 : f32
      %cst_25 = arith.constant 0.00166666671 : f32
      %35 = arith.mulf %33, %cst_25 : f32
      %36 = arith.mulf %34, %34 : f32
      %37 = arith.subf %35, %36 : f32
      %cst_26 = arith.constant 9.99999974E-6 : f32
      %38 = arith.addf %37, %cst_26 : f32
      %39 = math.rsqrt %38 : f32
      %40 = vector.broadcast %34 : f32 to vector<8x128xf32>
      %c0_27 = arith.constant 0 : index
      %c0_28 = arith.constant 0 : index
      %c0_29 = arith.constant 0 : index
      %41 = vector.load %arg3[%c0_27, %c0_28, %c0_29] : memref<1x8x128xf32, #tpu.memory_space<vmem>>, vector<1x8x128xf32>
      %42 = vector.shape_cast %41 : vector<1x8x128xf32> to vector<8x128xf32>
      %43 = vector.shape_cast %40 : vector<8x128xf32> to vector<1x8x128xf32>
      tpu.vector_store %arg3[%c0_27, %c0_28, %c0_29], %43 {strides = array<i32>} : memref<1x8x128xf32, #tpu.memory_space<vmem>>, vector<1x8x128xf32>,
      %44 = vector.broadcast %39 : f32 to vector<8x128xf32>
      %c0_30 = arith.constant 0 : index
      %c0_31 = arith.constant 0 : index
      %c0_32 = arith.constant 0 : index
      %45 = vector.load %arg4[%c0_30, %c0_31, %c0_32] : memref<1x8x128xf32, #tpu.memory_space<vmem>>, vector<1x8x128xf32>
      %46 = vector.shape_cast %45 : vector<1x8x128xf32> to vector<8x128xf32>
      %47 = vector.shape_cast %44 : vector<8x128xf32> to vector<1x8x128xf32>
      tpu.vector_store %arg4[%c0_30, %c0_31, %c0_32], %47 {strides = array<i32>} : memref<1x8x128xf32, #tpu.memory_space<vmem>>, vector<1x8x128xf32>,
    } else {
    }
    return
  }
  func.func @transform_0(%arg0: i32, %arg1: i32) -> (i32, i32, i32, i32) {
    %c0_i32 = arith.constant 0 : i32
    %c0_i32_0 = arith.constant 0 : i32
    %c0_i32_1 = arith.constant 0 : i32
    return %arg0, %c0_i32, %c0_i32_0, %arg1 : i32, i32, i32, i32
  }
  func.func @transform_1(%arg0: i32, %arg1: i32) -> (i32, i32, i32) {
    %c0_i32 = arith.constant 0 : i32
    %c0_i32_0 = arith.constant 0 : i32
    %c0_i32_1 = arith.constant 0 : i32
    return %arg0, %c0_i32, %c0_i32_0 : i32, i32, i32
  }
  func.func @transform_2(%arg0: i32, %arg1: i32) -> (i32, i32, i32) {
    %c0_i32 = arith.constant 0 : i32
    %c0_i32_0 = arith.constant 0 : i32
    %c0_i32_1 = arith.constant 0 : i32
    return %arg0, %c0_i32, %c0_i32_0 : i32, i32, i32
  }
}

</mosaic_0001>

<llo_original>
// kernel: tpu_custom_call.1
$region0: #{tpu_custom_call.1}
  #allocation0 [shape = 'u32[]', space=smem, size = 0x4, offset = 0x4, fixed_abs, tag = 'smem constant byte address 0x4 - core index']
  #allocation1 [shape = 'u32[72,128]{1,0:T(1,128)}', space=vmem, size = 0x9000, scoped, tag = 'internal scratch']
  #allocation2 [shape = 'f32[2,128]{1,0:T(2,128)}', space=vmem, size = 0x400, scoped, tag = 'scratch operand']
  #allocation3 [shape = 'f32[2,128]{1,0:T(2,128)}', space=vmem, size = 0x400, scoped, tag = 'scratch operand']
  %s0 = inlined_call_operand.hbm [shape: f32[4,3,2,384], index: 0, kind: input, shape index: {}]
  %s1 = inlined_call_operand.hbm [shape: f32[4,8,128], index: 1, kind: output, shape index: {0}]
  %s2 = inlined_call_operand.hbm [shape: f32[4,8,128], index: 2, kind: output, shape index: {1}]
  %3 = xla_tuple %s1, %s2
  %s4 = sld [smem:[#allocation0]]
  $region57: #{tpu_custom_call.1} parent=0
    _
  %s6 = ssub.s32 1, %s4
  %s7 = scalar_select 0, %s6, %s4
  $region1: #{tpu_custom_call.1} parent=0
    #allocation4 [shape = 'u8[6144]{0}', space=vmem, size = 0x1800, scoped, tag = 'input window, operand 0']
    #allocation5 [shape = 's32[2]{0}', space=sflag, size = 0x8, scoped, tag = 'scoped memory for tpu_custom_call.1']
    #allocation6 [shape = 's32[2]{0}', space=sflag, size = 0x8, scoped, tag = 'scoped memory for tpu_custom_call.1']
    #allocation7 [shape = 'u8[8192]{0}', space=vmem, size = 0x2000, scoped, tag = 'output window, operand 0']
    #allocation8 [shape = 'u8[8192]{0}', space=vmem, size = 0x2000, scoped, tag = 'output window, operand 1']
    #allocation9 [shape = 's32[2]{0}', space=sflag, size = 0x8, scoped, tag = 'scoped memory for tpu_custom_call.1']
    %8 = vsyncpa [#allocation5], 0
    %s9 = scalar_lea.sflag [#allocation5], 1
    %10 = vsyncpa %s9, 0
    %11 = vsyncpa [#allocation6], 0
    %s12 = scalar_lea.sflag [#allocation6], 1
    %13 = vsyncpa %s12, 0
    %14 = vsyncpa [#allocation9], 0
    %s15 = scalar_lea.sflag [#allocation9], 1
    %16 = vsyncpa %s15, 0
    loop: start=0, step=1, limit=14
    $region2: #{tpu_custom_call.1} parent=1 // loop_pre_header
      _
    $region3: #{tpu_custom_call.1} parent=1 // loop_header
      %s18 = sphi 0, %s22
      %p19 = scmp.ge.s32.totalorder %s18, 14
      %s25 = sphi 0, %s37
      %s26 = sphi 0, %s33
      %s27 = sphi 0, %s25
      %s28 = sphi 0, %s26
      %s29 = sphi 0, %s27
      %s30 = sphi 0, %s28
      %s42 = sphi 0, %s44
      %s45 = sphi 0, %s42
      %s46 = sphi 0, %s45
      %s62 = sphi 0, %s46
      %s68 = sphi 0, %s70
      %s71 = sphi 0, %s68
      %s72 = sphi 0, %s71
      %s88 = sphi 0, %s72
      %s94 = sphi 0, %s96
      %s97 = sphi 0, %s94
      %s98 = sphi 0, %s97
      %s114 = sphi 0, %s98
    $region4: #{tpu_custom_call.1} parent=1 // loop_header_branch
      %21 = sbr.rel (%p19) target = $region8
    $region5: #{tpu_custom_call.1} parent=1 // loop_body
      %s23 = ssub.s32 %s18, 1
      %s24 = ssub.s32 %s18, 2
      %s31 = sadd.s32 1, %s26
      %p32 = scmp.ge.s32.totalorder %s31, 3
      %s33 = scalar_select %p32, 0, %s31
      %s34 = sadd.s32 1, %s25
      %s35 = scalar_select %p32, %s34, %s25
      %p36 = scmp.ge.s32.totalorder %s35, 4
      %s37 = scalar_select %p36, 0, %s35
      %s38 = ssub.s32 %s25, %s37
      %s39 = ssub.s32 %s26, %s33
      %s40 = sor.u32 %s38, %s39
      %p41 = scmp.eq.s32.totalorder %s40, 0
      %s43 = sadd.s32 %s42, 1
      %s44 = scalar_select %p41, %s42, %s43
      %p47 = pneg %p41
      %p48 = scmp.eq.s32.totalorder %s18, 11
      %p49 = por %p47, %p48
      %p50 = scmp.ne.s32.totalorder %s42, %s45
      %p51 = scmp.eq.s32.totalorder %s18, 0
      %p52 = por %p50, %p51
      %p53 = scmp.ne.s32.totalorder %s42, %s45
      %p54 = scmp.eq.s32.totalorder %s23, 11
      %p55 = por %p53, %p54
      %p56 = scmp.ne.s32.totalorder %s45, %s46
      %p57 = scmp.eq.s32.totalorder %s23, 0
      %p58 = por %p56, %p57
      %p59 = scmp.ne.s32.totalorder %s45, %s46
      %p60 = scmp.eq.s32.totalorder %s24, 11
      %p61 = por %p59, %p60
      %p63 = scmp.ne.s32.totalorder %s46, %s62
      %p64 = scmp.eq.s32.totalorder %s24, 0
      %p65 = por %p63, %p64
      %s66 = ssub.s32 %s25, %s37
      %p67 = scmp.eq.s32.totalorder %s66, 0
      %s69 = sadd.s32 %s68, 1
      %s70 = scalar_select %p67, %s68, %s69
      %p73 = pneg %p67
      %p74 = scmp.eq.s32.totalorder %s18, 11
      %p75 = por %p73, %p74
      %p76 = scmp.ne.s32.totalorder %s68, %s71
      %p77 = scmp.eq.s32.totalorder %s18, 0
      %p78 = por %p76, %p77
      %p79 = scmp.ne.s32.totalorder %s68, %s71
      %p80 = scmp.eq.s32.totalorder %s23, 11
      %p81 = por %p79, %p80
      %p82 = scmp.ne.s32.totalorder %s71, %s72
      %p83 = scmp.eq.s32.totalorder %s23, 0
      %p84 = por %p82, %p83
      %p85 = scmp.ne.s32.totalorder %s71, %s72
      %p86 = scmp.eq.s32.totalorder %s24, 11
      %p87 = por %p85, %p86
      %p89 = scmp.ne.s32.totalorder %s72, %s88
      %p90 = scmp.eq.s32.totalorder %s24, 0
      %p91 = por %p89, %p90
      %s92 = ssub.s32 %s25, %s37
      %p93 = scmp.eq.s32.totalorder %s92, 0
      %s95 = sadd.s32 %s94, 1
      %s96 = scalar_select %p93, %s94, %s95
      %p99 = pneg %p93
      %p100 = scmp.eq.s32.totalorder %s18, 11
      %p101 = por %p99, %p100
      %p102 = scmp.ne.s32.totalorder %s94, %s97
      %p103 = scmp.eq.s32.totalorder %s18, 0
      %p104 = por %p102, %p103
      %p105 = scmp.ne.s32.totalorder %s94, %s97
      %p106 = scmp.eq.s32.totalorder %s23, 11
      %p107 = por %p105, %p106
      %p108 = scmp.ne.s32.totalorder %s97, %s98
      %p109 = scmp.eq.s32.totalorder %s23, 0
      %p110 = por %p108, %p109
      %p111 = scmp.ne.s32.totalorder %s97, %s98
      %p112 = scmp.eq.s32.totalorder %s24, 11
      %p113 = por %p111, %p112
      %p115 = scmp.ne.s32.totalorder %s98, %s114
      %p116 = scmp.eq.s32.totalorder %s24, 0
      %p117 = por %p115, %p116
      %p118 = scmp.le.s32.totalorder 1, %s18
      %p119 = scmp.lt.s32.totalorder %s18, 13
      %p120 = pnand %p118, %p119
      %p121 = pneg %p120
      // Predicated region
      $region9: #{tpu_custom_call.1} parent=5 // pred_check
        _
      $region10: #{tpu_custom_call.1} parent=5 // pred_check_branch
        %123 = sbr.rel (%p120) target = $region12
      $region11: #{tpu_custom_call.1} parent=5 // pred_region
        %s124 = ssub.s32 %s18, 1
      $region12: #{tpu_custom_call.1} parent=5 // pred_fallthru
        _
      %p125 = scmp.lt.s32.totalorder %s18, 12
      // Predicated region
      $region13: #{tpu_custom_call.1} parent=5 // pred_check
        %p126 = pneg %p125
      $region14: #{tpu_custom_call.1} parent=5 // pred_check_branch
        %128 = sbr.rel (%p126) target = $region16
      $region15: #{tpu_custom_call.1} parent=5 // pred_region
        // Predicated region
        $region17: #{tpu_custom_call.1} parent=15 // pred_check
          %p129 = pneg %p52
        $region18: #{tpu_custom_call.1} parent=15 // pred_check_branch
          %131 = sbr.rel (%p129) target = $region20
        $region19: #{tpu_custom_call.1} parent=15 // pred_region
          %s132 = sand.u32 %s42, 1
          %s133 = scalar_lea.sflag [#allocation5], %s132
          %s134 = sand.u32 %s42, 1
          %s135 = smul.addr %s134, 6
          %s136 = scalar_lea.vmem [#allocation4], %s135
          %138 = vsyncadd %s133, 0
          %s139 = smul.addr %s25, 9
          %s140 = sadd.s32 %s26, %s139
          %s141 = smul.addr %s140, 2
          %s142 = scalar_lea.hbm %s0, %s141
          %s143 = sshll.u32 %s142, 4
          %s144 = int_to_ptr.hbm [resolvable:$true] %s143
          %s145 = sshll.u32 %s136, 4
          %s146 = int_to_ptr.vmem [resolvable:$true] %s145
          %151 = dma.hbm_to_vmem [thread:$0]  %s144, 96, %s146, %s133, 96, 32, 2
        $region20: #{tpu_custom_call.1} parent=15 // pred_fallthru
          _
      $region16: #{tpu_custom_call.1} parent=5 // pred_fallthru
        _
      %p152 = scmp.le.s32.totalorder 1, %s18
      %p153 = scmp.lt.s32.totalorder %s18, 13
      %p154 = pnand %p152, %p153
      %p155 = pneg %p154
      // Predicated region
      $region21: #{tpu_custom_call.1} parent=5 // pred_check
        _
      $region22: #{tpu_custom_call.1} parent=5 // pred_check_branch
        %157 = sbr.rel (%p154) target = $region24
      $region23: #{tpu_custom_call.1} parent=5 // pred_region
        %s158 = ssub.s32 %s18, 1
        %s159 = sand.u32 %s45, 1
        %s160 = scalar_lea.sflag [#allocation5], %s159
        %s161 = sand.u32 %s45, 1
        %s162 = smul.addr %s161, 6
        %s163 = scalar_lea.vmem [#allocation4], %s162
        // Predicated region
        $region25: #{tpu_custom_call.1} parent=23 // pred_check
          %p164 = pneg %p58
        $region26: #{tpu_custom_call.1} parent=23 // pred_check_branch
          %166 = sbr.rel (%p164) target = $region28
        $region27: #{tpu_custom_call.1} parent=23 // pred_region
          %168 = dma.done %s160, 96
        $region28: #{tpu_custom_call.1} parent=23 // pred_fallthru
          _
        %s169 = sand.u32 %s45, 1
        %s170 = scalar_lea.sflag [#allocation5], %s169
        %s171 = sand.u32 %s45, 1
        %s172 = smul.addr %s171, 6
        %s173 = scalar_lea.vmem [#allocation4], %s172
        %p174 = pneg %p58
        %p175 = pneg %p55
        %p176 = pneg %p84
        %p177 = pneg %p81
        %s178 = sand.u32 %s71, 1
        %s179 = scalar_lea.sflag [#allocation6], %s178
        %s180 = sand.u32 %s71, 1
        %s181 = smul.addr %s180, 8
        %s182 = scalar_lea.vmem [#allocation7], %s181
        %p183 = pneg %p110
        %p184 = pneg %p107
        %s185 = sand.u32 %s97, 1
        %s186 = scalar_lea.sflag [#allocation9], %s185
        %s187 = sand.u32 %s97, 1
        %s188 = smul.addr %s187, 8
        %s189 = scalar_lea.vmem [#allocation8], %s188
        %p190 = scmp.eq.s32.totalorder %s28, 0
        // Predicated region
        $region29: #{tpu_custom_call.1} parent=23 // pred_check
          %p191 = pneg %p190
        $region30: #{tpu_custom_call.1} parent=23 // pred_check_branch
          %193 = sbr.rel (%p191) target = $region32
        $region31: #{tpu_custom_call.1} parent=23 // pred_region
          %194 = vst [vmem:[#allocation2] sm:$0x3] 0.0
          %195 = vst [vmem:[#allocation3] sm:$0x3] 0.0
        $region32: #{tpu_custom_call.1} parent=23 // pred_fallthru
          _
        %v196 = vld [vmem:[%s163] sm:$0x3]
        %s197 = scalar_lea.vmem %s163, 2 [#allocation4]
        %v198 = vld [vmem:[%s197] sm:$0x3]
        %s199 = scalar_lea.vmem %s163, 4 [#allocation4]
        %v200 = vld [vmem:[%s199] sm:$0x3]
        %v201 = vmul.f32 %v196, %v196
        %v202 = vmul.f32 %v198, %v198
        %v203 = vadd.f32 %v201, %v202
        %v204 = vmul.f32 %v200, %v200
        %v205 = vadd.f32 %v203, %v204
        %v206 = vld [vmem:[#allocation2] sm:$0x3]
        %v207 = vrsqrt.pop %v205
        %v208 = vmul.f32 %v207, %v205
        %v209 = vmul.f32 %v208, %v207
        %v210 = vmul.f32 0.5, %v209
        %v211 = vsub.f32 1.5, %v210
        %v212 = vmul.f32 %v207, %v211
        %v213 = vmul.f32 %v205, %v212
        %vm214 = vcmp.eq.f32.partialorder %v205, inf
        %v215 = vsel %vm214, %v205, %v213
        %vm216 = vcmp.eq.f32.partialorder %v205, 0.0
        %v217 = vand.u32 %v205, 2147483648
        %v218 = vsel %vm216, %v217, %v215
        %v219 = vadd.f32 %v206, %v218
        %220 = vst [vmem:[#allocation2] sm:$0x3] %v219
        %v221 = vld [vmem:[#allocation3] sm:$0x3]
        %v222 = vadd.f32 %v221, %v205
        %223 = vst [vmem:[#allocation3] sm:$0x3] %v222
        %p224 = scmp.eq.s32.totalorder %s28, 2
        // Predicated region
        $region33: #{tpu_custom_call.1} parent=23 // pred_check
          %p225 = pneg %p224
        $region34: #{tpu_custom_call.1} parent=23 // pred_check_branch
          %227 = sbr.rel (%p225) target = $region36
        $region35: #{tpu_custom_call.1} parent=23 // pred_region
          %v228 = vld [vmem:[#allocation2] sm:$0x3]
          %vm229 = vcmask 1041408
          %v230 = vsel %vm229, %v228, 0.0
          %231 = vadd.xlane.f32.xlu0 %v230
          %v232 = vpop.xlane.xlu0 %231
          %v233 = vrot.slane %v232, 4
          %v234 = vadd.f32 %v232, %v233
          %v235 = vrot.slane %v234, 2
          %v236 = vadd.f32 %v234, %v235
          %v237 = vrot.slane %v236, 1
          %v238 = vadd.f32 %v236, %v237
          %s239 = vtos %v238
          %v240 = vld [vmem:[#allocation3] sm:$0x3]
          %v241 = vsel %vm229, %v240, 0.0
          %242 = vadd.xlane.f32.xlu0 %v241
          %v243 = vpop.xlane.xlu0 %242
          %v244 = vrot.slane %v243, 4
          %v245 = vadd.f32 %v243, %v244
          %v246 = vrot.slane %v245, 2
          %v247 = vadd.f32 %v245, %v246
          %v248 = vrot.slane %v247, 1
          %v249 = vadd.f32 %v247, %v248
          %s250 = vtos %v249
          %s251 = smul.f32 %s239, 0.0016666667
          %s252 = smul.f32 %s250, 0.0016666667
          %s253 = smul.f32 %s251, %s251
          %s254 = ssub.f32 %s252, %s253
          %s255 = sadd.f32 %s254, 1e-05
          %v256 = vstv %s255
          %v257 = vrsqrt.pop %v256
          %v258 = vmul.f32 %v257, %v256
          %v259 = vmul.f32 %v258, %v257
          %v260 = vmul.f32 0.5, %v259
          %v261 = vsub.f32 1.5, %v260
          %v262 = vmul.f32 %v257, %v261
          %vm263 = vweird.f32 %v256
          %vm264 = vweird.f32 %v257
          %vm265 = vmor %vm263, %vm264
          %v266 = vsel %vm265, %v257, %v262
          %s267 = vtos %v266
          %v268 = vstv %s251
          %269 = vst [vmem:[%s182] sm:$0xff] %v268
          %v270 = vstv %s267
          %271 = vst [vmem:[%s189] sm:$0xff] %v270
        $region36: #{tpu_custom_call.1} parent=23 // pred_fallthru
          _
        %s272 = sand.u32 %s71, 1
        %s273 = scalar_lea.sflag [#allocation6], %s272
        %s274 = sand.u32 %s71, 1
        %s275 = smul.addr %s274, 8
        %s276 = scalar_lea.vmem [#allocation7], %s275
        %s277 = sand.u32 %s97, 1
        %s278 = scalar_lea.sflag [#allocation9], %s277
        %s279 = sand.u32 %s97, 1
        %s280 = smul.addr %s279, 8
        %s281 = scalar_lea.vmem [#allocation8], %s280
        // Predicated region
        $region37: #{tpu_custom_call.1} parent=23 // pred_check
          %p282 = pneg %p81
        $region38: #{tpu_custom_call.1} parent=23 // pred_check_branch
          %284 = sbr.rel (%p282) target = $region40
        $region39: #{tpu_custom_call.1} parent=23 // pred_region
          %286 = vsyncadd %s273, 0
          %s287 = smul.addr %s27, 8
          %s288 = scalar_lea.hbm %s1, %s287
          %s290 = sshll.u32 %s276, 4
          %s291 = int_to_ptr.vmem [resolvable:$true] %s290
          %s292 = sshll.u32 %s288, 4
          %s293 = int_to_ptr.hbm [resolvable:$true] %s292
          %295 = dma.vmem_to_hbm [thread:$0]  %s291, 128, %s293, %s273
        $region40: #{tpu_custom_call.1} parent=23 // pred_fallthru
          _
        // Predicated region
        $region41: #{tpu_custom_call.1} parent=23 // pred_check
          %p296 = pneg %p107
        $region42: #{tpu_custom_call.1} parent=23 // pred_check_branch
          %298 = sbr.rel (%p296) target = $region44
        $region43: #{tpu_custom_call.1} parent=23 // pred_region
          %300 = vsyncadd %s278, 0
          %s301 = smul.addr %s27, 8
          %s302 = scalar_lea.hbm %s2, %s301
          %s304 = sshll.u32 %s281, 4
          %s305 = int_to_ptr.vmem [resolvable:$true] %s304
          %s306 = sshll.u32 %s302, 4
          %s307 = int_to_ptr.hbm [resolvable:$true] %s306
          %309 = dma.vmem_to_hbm [thread:$0]  %s305, 128, %s307, %s278
        $region44: #{tpu_custom_call.1} parent=23 // pred_fallthru
          _
      $region24: #{tpu_custom_call.1} parent=5 // pred_fallthru
        _
      %p310 = scmp.le.s32.totalorder 2, %s18
      // Predicated region
      $region45: #{tpu_custom_call.1} parent=5 // pred_check
        %p311 = pneg %p310
      $region46: #{tpu_custom_call.1} parent=5 // pred_check_branch
        %313 = sbr.rel (%p311) target = $region48
      $region47: #{tpu_custom_call.1} parent=5 // pred_region
        %s314 = ssub.s32 %s18, 2
        // Predicated region
        $region49: #{tpu_custom_call.1} parent=47 // pred_check
          %p315 = pneg %p87
        $region50: #{tpu_custom_call.1} parent=47 // pred_check_branch
          %317 = sbr.rel (%p315) target = $region52
        $region51: #{tpu_custom_call.1} parent=47 // pred_region
          %s318 = sand.u32 %s72, 1
          %s319 = scalar_lea.sflag [#allocation6], %s318
          %s320 = sand.u32 %s72, 1
          %s321 = smul.addr %s320, 8
          %s322 = scalar_lea.vmem [#allocation7], %s321
          %324 = dma.done %s319, 128
        $region52: #{tpu_custom_call.1} parent=47 // pred_fallthru
          _
        // Predicated region
        $region53: #{tpu_custom_call.1} parent=47 // pred_check
          %p325 = pneg %p113
        $region54: #{tpu_custom_call.1} parent=47 // pred_check_branch
          %327 = sbr.rel (%p325) target = $region56
        $region55: #{tpu_custom_call.1} parent=47 // pred_region
          %s328 = sand.u32 %s98, 1
          %s329 = scalar_lea.sflag [#allocation9], %s328
          %s330 = sand.u32 %s98, 1
          %s331 = smul.addr %s330, 8
          %s332 = scalar_lea.vmem [#allocation8], %s331
          %334 = dma.done %s329, 128
        $region56: #{tpu_custom_call.1} parent=47 // pred_fallthru
          _
      $region48: #{tpu_custom_call.1} parent=5 // pred_fallthru
        _
    $region6: #{tpu_custom_call.1} parent=1 // loop_footer
      %s22 = sadd.s32 1, %s18
    $region7: #{tpu_custom_call.1} parent=1 // loop_footer_branch
      %17 = sbr.rel target = $region3
    $region8: #{tpu_custom_call.1} parent=1 // loop_exit
      _
    %335 = vsyncpa [#allocation5], 1
    %s336 = scalar_lea.sflag [#allocation5], 1
    %337 = vsyncpa %s336, 1
    %338 = vsyncpa [#allocation6], 1
    %s339 = scalar_lea.sflag [#allocation6], 1
    %340 = vsyncpa %s339, 1
    %341 = vsyncpa [#allocation9], 1
    %s342 = scalar_lea.sflag [#allocation9], 1
    %343 = vsyncpa %s342, 1

</llo_original>
